<compile_context>
chip_gen: v7x
topology: tpu7x:2x2x1
jax: 0.10.0
libtpu: 0.0.40
codegen_flags: <defaults>
</compile_context>

<pallas_src>
import jax
import jax.numpy as jnp
import numpy as np
from jax import lax
from jax.experimental import pallas as pl
from jax.experimental.pallas import tpu as pltpu


def precompute_freqs(head_dim: int, seq_len: int, theta: float = 10000.0):
    """Same math as precompute_theta_pos_freq, returning expanded interleaved
    full-D tables:
        cos_full[s, 2i] = cos_full[s, 2i+1] =  cos(m * theta_i)
        sin_full[s, 2i] = -sin(m * theta_i),  sin_full[s, 2i+1] = +sin(m * theta_i)
    so the kernel needs no even/odd de-interleaving."""
    assert head_dim % 2 == 0
    theta_num = jnp.arange(0, head_dim, 2, dtype=jnp.float32)          # (D/2,)
    inv_freq = 1.0 / (theta ** (theta_num / head_dim))                 # (D/2,)
    m = jnp.arange(seq_len, dtype=jnp.float32)                         # (S,)
    freqs = jnp.outer(m, inv_freq)                                     # (S, D/2)
    cos = jnp.cos(freqs)
    sin = jnp.sin(freqs)
    cos_full = jnp.stack([cos, cos], axis=-1).reshape(seq_len, head_dim)
    sin_full = jnp.stack([-sin, sin], axis=-1).reshape(seq_len, head_dim)
    return cos_full, sin_full                                          # each (S, D)


def rope_kernel(x_ref, cos_ref, sin_ref, o_ref):
    # x_ref block: (rows_tile, L) with L = S*D; cos/sin block: (1, L).
    x = x_ref[...].astype(jnp.float32)      # f32 compute, matches torch .float()
    c = cos_ref[...]                        # (1, L), broadcasts over rows
    s = sin_ref[...]                        # (1, L), sign of sin folded in
    L = x.shape[-1]
    # swap_pairs: swapped[..., 2i] = x[..., 2i+1]; swapped[..., 2i+1] = x[..., 2i].
    # Built from circular lane rotations (XLU) + parity select; the circular
    # wrap-around elements are discarded by the select.
    nxt = pltpu.roll(x, L - 1, 1)           # nxt[j] = x[(j + 1) % L]
    prv = pltpu.roll(x, 1, 1)               # prv[j] = x[(j - 1) % L]
    lane = lax.broadcasted_iota(jnp.int32, x.shape, 1)
    swapped = jnp.where((lane & 1) == 0, nxt, prv)
    o_ref[...] = (x * c + swapped * s).astype(o_ref.dtype)


def _choose_row_tile(n_rows: int, row_bytes: int, target_bytes: int = 2 << 20) -> int:
    """Pick the fused (B*H) row tile: a divisor of n_rows that is either the
    full extent or a multiple of 8 (keeps the (8,128) block constraint), sized
    to ~target_bytes per input buffer, preferring >= 2 grid steps."""
    cands = {n_rows}
    cands.update(r for r in range(8, n_rows + 1, 8) if n_rows % r == 0)
    fitting = [r for r in cands if r * row_bytes <= target_bytes]
    if fitting:
        multi = [r for r in fitting if n_rows // r >= 2]   # keep both v7x TCs busy
        return max(multi) if multi else max(fitting)
    return min(cands)


@jax.jit
def rope_forward(x, cos_full, sin_full):
    B, H, S, D = x.shape
    assert cos_full.shape == (S, D) and sin_full.shape == (S, D)
    n_rows = B * H
    L = S * D

    # Row-major reshapes are free; they just present a lane-dense layout.
    x2 = x.reshape(n_rows, L)
    cos2 = cos_full.astype(jnp.float32).reshape(1, L)
    sin2 = sin_full.astype(jnp.float32).reshape(1, L)

    rt = _choose_row_tile(n_rows, L * x2.dtype.itemsize)
    grid = (n_rows // rt,)

    n_elems = x.size
    cost = pl.CostEstimate(
        flops=6 * n_elems,
        transcendentals=0,
        bytes_accessed=2 * n_elems * x.dtype.itemsize + 2 * L * 4,
    )

    out2 = pl.pallas_call(
        rope_kernel,
        out_shape=jax.ShapeDtypeStruct((n_rows, L), x.dtype),
        grid_spec=pltpu.PrefetchScalarGridSpec(
            num_scalar_prefetch=0,
            grid=grid,
            in_specs=[
                pl.BlockSpec((rt, L), lambda i: (i, 0)),
                pl.BlockSpec((1, L), lambda i: (0, 0)),
                pl.BlockSpec((1, L), lambda i: (0, 0)),
            ],
            out_specs=pl.BlockSpec((rt, L), lambda i: (i, 0)),
        ),
        compiler_params=pltpu.CompilerParams(
            dimension_semantics=("parallel",)),
        cost_estimate=cost,
    )(x2, cos2, sin2)
    return out2.reshape(B, H, S, D)


def rope_reference(x, theta: float = 10000.0):
    """Pure-JAX reference mirroring the PyTorch complex-multiply semantics,
    built independently of the expanded kernel tables."""
    B, H, S, D = x.shape
    theta_num = jnp.arange(0, D, 2, dtype=jnp.float32)
    inv_freq = 1.0 / (theta ** (theta_num / D))
    freqs = jnp.outer(jnp.arange(S, dtype=jnp.float32), inv_freq)      # (S, D/2)
    c = jnp.cos(freqs)[None, None]
    s = jnp.sin(freqs)[None, None]
    xr = x.astype(jnp.float32).reshape(B, H, S, D // 2, 2)
    a, b = xr[..., 0], xr[..., 1]
    out = jnp.stack([a * c - b * s, a * s + b * c], axis=-1).reshape(B, H, S, D)
    return out.astype(x.dtype)


if __name__ == "__main__":
    B, H, S, D = 2, 4, 8, 32            # batch, heads, seq_len, head_dim
    theta = 10000.0

    key = jax.random.PRNGKey(0)
    x = jax.random.normal(key, (B, H, S, D), dtype=jnp.float32)

    cos_full, sin_full = precompute_freqs(D, S, theta)

    out = jax.block_until_ready(rope_forward(x, cos_full, sin_full))

    ref = rope_reference(x, theta)
    np.testing.assert_allclose(np.asarray(out), np.asarray(ref),
                               rtol=1e-5, atol=1e-5)
    print("KERNEL_OK")
</pallas_src>

<mosaic_0001>
module attributes {stable_mosaic.version = 11 : i64} {
  func.func @rope_kernel(%arg0: i32, %arg1: memref<8x256xf32, #tpu.memory_space<vmem>>, %arg2: memref<1x256xf32, #tpu.memory_space<vmem>>, %arg3: memref<1x256xf32, #tpu.memory_space<vmem>>, %arg4: memref<8x256xf32, #tpu.memory_space<vmem>>) attributes {dimension_semantics = [#tpu.dimension_semantics<parallel>], iteration_bounds = array<i64: 1>, scalar_prefetch = 0 : i64, scratch_operands = 0 : i64, tpu.core_type = #tpu.core_type<tc>, window_params = [{transform_indices = @transform_0, window_bounds = array<i64: 8, 256>}, {pipeline_mode = #tpu.pipeline_mode<synchronous>, transform_indices = @transform_1, window_bounds = array<i64: 1, 256>}, {pipeline_mode = #tpu.pipeline_mode<synchronous>, transform_indices = @transform_2, window_bounds = array<i64: 1, 256>}, {transform_indices = @transform_3, window_bounds = array<i64: 8, 256>}]} {
    %c0 = arith.constant 0 : index
    %c0_0 = arith.constant 0 : index
    %0 = vector.load %arg1[%c0, %c0_0] : memref<8x256xf32, #tpu.memory_space<vmem>>, vector<8x256xf32>
    %c0_1 = arith.constant 0 : index
    %c0_2 = arith.constant 0 : index
    %1 = vector.load %arg2[%c0_1, %c0_2] : memref<1x256xf32, #tpu.memory_space<vmem>>, vector<1x256xf32>
    %c0_3 = arith.constant 0 : index
    %c0_4 = arith.constant 0 : index
    %2 = vector.load %arg3[%c0_3, %c0_4] : memref<1x256xf32, #tpu.memory_space<vmem>>, vector<1x256xf32>
    %c255_i32 = arith.constant 255 : i32
    %3 = tpu.dynamic_rotate %0 by %c255_i32 dim 1 : vector<8x256xf32>, i32 -> vector<8x256xf32>
    %c1_i32 = arith.constant 1 : i32
    %4 = tpu.dynamic_rotate %0 by %c1_i32 dim 1 : vector<8x256xf32>, i32 -> vector<8x256xf32>
    %5 = tpu.iota {dimensions = array<i32: 1>} : vector<8x256xi32>
    %c1_i32_5 = arith.constant 1 : i32
    %6 = vector.broadcast %c1_i32_5 : i32 to vector<8x256xi32>
    %7 = arith.andi %5, %6 : vector<8x256xi32>
    %c0_i32 = arith.constant 0 : i32
    %8 = vector.broadcast %c0_i32 : i32 to vector<8x256xi32>
    %9 = arith.cmpi eq, %7, %8 : vector<8x256xi32>
    %10 = arith.select %9, %3, %4 : vector<8x256xi1>, vector<8x256xf32>
    %11 = vector.broadcast %1 : vector<1x256xf32> to vector<8x256xf32>
    %12 = arith.mulf %0, %11 : vector<8x256xf32>
    %13 = vector.broadcast %2 : vector<1x256xf32> to vector<8x256xf32>
    %14 = arith.mulf %10, %13 : vector<8x256xf32>
    %15 = arith.addf %12, %14 : vector<8x256xf32>
    %c0_6 = arith.constant 0 : index
    %c0_7 = arith.constant 0 : index
    %16 = vector.load %arg4[%c0_6, %c0_7] : memref<8x256xf32, #tpu.memory_space<vmem>>, vector<8x256xf32>
    tpu.vector_store %arg4[%c0_6, %c0_7], %15 {strides = array<i32>} : memref<8x256xf32, #tpu.memory_space<vmem>>, vector<8x256xf32>,
    return
  }
  func.func @transform_0(%arg0: i32) -> (i32, i32) {
    %c0_i32 = arith.constant 0 : i32
    %c0_i32_0 = arith.constant 0 : i32
    return %arg0, %c0_i32 : i32, i32
  }
  func.func @transform_1(%arg0: i32) -> (i32, i32) {
    %c0_i32 = arith.constant 0 : i32
    %c0_i32_0 = arith.constant 0 : i32
    %c0_i32_1 = arith.constant 0 : i32
    return %c0_i32, %c0_i32_0 : i32, i32
  }
  func.func @transform_2(%arg0: i32) -> (i32, i32) {
    %c0_i32 = arith.constant 0 : i32
    %c0_i32_0 = arith.constant 0 : i32
    %c0_i32_1 = arith.constant 0 : i32
    return %c0_i32, %c0_i32_0 : i32, i32
  }
  func.func @transform_3(%arg0: i32) -> (i32, i32) {
    %c0_i32 = arith.constant 0 : i32
    %c0_i32_0 = arith.constant 0 : i32
    return %arg0, %c0_i32 : i32, i32
  }
}

</mosaic_0001>

<llo_original>
// kernel: rope_forward.1
$region0: #{rope_forward.1}
  #allocation0 [shape = 'u32[]', space=smem, size = 0x4, offset = 0x4, fixed_abs, tag = 'smem constant byte address 0x4 - core index']
  #allocation1 [shape = 'u32[144,128]{1,0:T(1,128)}', space=vmem, size = 0x12000, scoped, tag = 'internal scratch']
  %s0 = inlined_call_operand.vmem [shape: f32[8,256], index: 0, kind: input, shape index: {}]
  %s1 = inlined_call_operand.vmem [shape: f32[1,256], index: 1, kind: input, shape index: {}]
  %s2 = inlined_call_operand.vmem [shape: f32[1,256], index: 2, kind: input, shape index: {}]
  %s3 = inlined_call_operand.vmem [shape: f32[8,256], index: 3, kind: output, shape index: {}]
  %s4 = sld [smem:[#allocation0]]
  $region22: #{rope_forward.1} parent=0
    _
  %s6 = ssub.s32 1, %s4
  %s7 = scalar_select 0, %s6, %s4
  // Predicated region
  $region2: #{rope_forward.1} parent=0 // pred_check
    _
  $region3: #{rope_forward.1} parent=0 // pred_check_branch
    %9 = sbr.rel (0) target = $region5
  $region4: #{rope_forward.1} parent=0 // pred_region
    _
  $region5: #{rope_forward.1} parent=0 // pred_fallthru
    _
  // Predicated region
  $region6: #{rope_forward.1} parent=0 // pred_check
    _
  $region7: #{rope_forward.1} parent=0 // pred_check_branch
    %11 = sbr.rel (0) target = $region9
  $region8: #{rope_forward.1} parent=0 // pred_region
    _
  $region9: #{rope_forward.1} parent=0 // pred_fallthru
    _
  // Predicated region
  $region10: #{rope_forward.1} parent=0 // pred_check
    _
  $region11: #{rope_forward.1} parent=0 // pred_check_branch
    %13 = sbr.rel (0) target = $region13
  $region12: #{rope_forward.1} parent=0 // pred_region
    _
  $region13: #{rope_forward.1} parent=0 // pred_fallthru
    _
  %v14 = vld [vmem:[%s0] sm:$0xff]
  %v15 = vld [vmem:[%s0 + $0x8] sm:$0xff]
  %v16 = vld [vmem:[%s1] sm:$0x3]
  %v17 = vld [vmem:[%s2] sm:$0x3]
  %18 = vrot.lane.b32.xlu0 %v14, 127
  %v19 = vpop.permute.xlu0 %18
  %20 = vrot.lane.b32.xlu0 %v15, 127
  %v21 = vpop.permute.xlu0 %20
  %v22 = vlaneseq
  %v23 = vand.u32 %v22, 127
  %vm24 = vcmp.lt.s32.totalorder %v23, 127
  %v25 = vsel %vm24, %v19, %v21
  %v26 = vsel %vm24, %v21, %v19
  %27 = vrot.lane.b32.xlu0 %v14, 1
  %v28 = vpop.permute.xlu0 %27
  %29 = vrot.lane.b32.xlu0 %v15, 1
  %v30 = vpop.permute.xlu0 %29
  %vm31 = vcmp.lt.s32.totalorder %v23, 1
  %v32 = vsel %vm31, %v28, %v30
  %v33 = vsel %vm31, %v30, %v28
  %v34 = vadd.s32 %v23, 128
  %v35 = vand.u32 %v23, 1
  %v36 = vand.u32 %v34, 1
  %vm37 = vcmp.eq.s32.totalorder %v35, 0
  %vm38 = vcmp.eq.s32.totalorder %v36, 0
  %v39 = vsel %vm37, %v25, %v33
  %v40 = vsel %vm38, %v26, %v32
  %v42 = vlaneseq
  %v43 = vshrl.u32 %v42, 7
  %v44 = vsub.s32 0, %v43
  %v45 = vrot.slane %v16, %v44
  %v46 = vlaneseq
  %v47 = vshrl.u32 %v46, 7
  %v48 = vsub.s32 1, %v47
  %v49 = vrot.slane %v16, %v48
  %v52 = vmul.f32 %v14, %v45
  %v53 = vmul.f32 %v15, %v49
  %v55 = vlaneseq
  %v56 = vshrl.u32 %v55, 7
  %v57 = vsub.s32 0, %v56
  %v58 = vrot.slane %v17, %v57
  %v59 = vlaneseq
  %v60 = vshrl.u32 %v59, 7
  %v61 = vsub.s32 1, %v60
  %v62 = vrot.slane %v17, %v61
  %v65 = vmul.f32 %v39, %v58
  %v66 = vmul.f32 %v40, %v62
  %v67 = vadd.f32 %v52, %v65
  %v68 = vadd.f32 %v53, %v66
  %69 = vst [vmem:[%s3] sm:$0xff] %v67
  %70 = vst [vmem:[%s3 + $0x8] sm:$0xff] %v68
  // Predicated region
  $region14: #{rope_forward.1} parent=0 // pred_check
    _
  $region15: #{rope_forward.1} parent=0 // pred_check_branch
    %72 = sbr.rel (0) target = $region17
  $region16: #{rope_forward.1} parent=0 // pred_region
    _
  $region17: #{rope_forward.1} parent=0 // pred_fallthru
    _
  // Predicated region
  $region18: #{rope_forward.1} parent=0 // pred_check
    _
  $region19: #{rope_forward.1} parent=0 // pred_check_branch
    %74 = sbr.rel (0) target = $region21
  $region20: #{rope_forward.1} parent=0 // pred_region
    _
  $region21: #{rope_forward.1} parent=0 // pred_fallthru
    _

</llo_original>
